<compile_context>
chip_gen: v5e
topology: v5e:2x2
jax: 0.10.0
libtpu: 0.0.40
codegen_flags: <defaults>
</compile_context>

<pallas_src>
import jax
import jax.numpy as jnp
from jax.experimental import pallas as pl
from jax.experimental.pallas import tpu as pltpu  # noqa: F401  (kept for TPU-specific tuning hooks)


def _scale_conv1x1_kernel(scale_ref, w_ref, x_ref, o_ref):
    # scale_ref: (1, Cin)     bf16 per-channel scale (from x109)
    # w_ref    : (Cout, Cin)  bf16 1x1 conv weight (no transpose needed)
    # x_ref    : (Cin, M)     bf16 channel-major activations (from x104)
    # o_ref    : (Cout, M)    f32
    # Fold the scale into the weight (160x640 < 196x640 elements); the (1, Cin)
    # broadcast is lane-aligned on the VPU.
    ws = w_ref[...] * scale_ref[...]
    # 1x1 conv == matmul: (Cout, Cin) @ (Cin, M) -> (Cout, M) on the MXU, f32 acc.
    o_ref[...] = jnp.dot(
        ws, x_ref[...], preferred_element_type=jnp.float32
    ).astype(o_ref.dtype)


def fused_scale_conv1x1(x_nchw, scale_nc11, weight):
    """Conv2d(Cin, Cout, 1, bias=False)(scale * x) for batch 1, fused in one kernel."""
    N, Cin, H, W = x_nchw.shape
    weight = weight.reshape(weight.shape[0], -1)        # accepts (Cout,Cin) or (Cout,Cin,1,1)
    Cout = weight.shape[0]
    assert N == 1, "module is defined for batch 1"
    M = H * W

    # All reshapes below are layout-preserving (no transposes, no HBM shuffles).
    x_cm = x_nchw.reshape(Cin, M).astype(jnp.bfloat16)            # (Cin, M)
    scale_row = scale_nc11.reshape(1, Cin).astype(jnp.bfloat16)   # (1, Cin)
    w = weight.astype(jnp.bfloat16)                               # (Cout, Cin)

    flops = 2 * M * Cin * Cout + Cout * Cin
    bytes_accessed = (x_cm.size + scale_row.size + w.size) * 2 + M * Cout * 4

    out_cm = pl.pallas_call(
        _scale_conv1x1_kernel,
        out_shape=jax.ShapeDtypeStruct((Cout, M), jnp.float32),
        cost_estimate=pl.CostEstimate(
            flops=flops, transcendentals=0, bytes_accessed=bytes_accessed
        ),
    )(scale_row, w, x_cm)

    # (Cout, M) -> (1, Cout, H, W): free reshape, no transpose.
    return out_cm.reshape(N, Cout, H, W)


if __name__ == "__main__":
    key = jax.random.PRNGKey(0)
    k1, k2, k3 = jax.random.split(key, 3)

    N, Cin, H, W = 1, 640, 14, 14
    Cout = 160

    x104 = jax.random.normal(k1, (N, Cin, H, W), dtype=jnp.float32)   # activations
    x109 = jax.random.normal(k2, (N, Cin, 1, 1), dtype=jnp.float32)   # SE-style scale
    weight = jax.random.normal(k3, (Cout, Cin), dtype=jnp.float32) * 0.02

    out = fused_scale_conv1x1(x104, x109, weight)
    out = jax.block_until_ready(out)
    assert out.shape == (N, Cout, H, W)

    # Tight reference: same bf16-rounded inputs, f32 math — isolates the kernel's
    # f32-accumulated matmul from the intentional bf16 input cast.
    xb = x104.astype(jnp.bfloat16).astype(jnp.float32).reshape(Cin, H * W)
    sb = x109.astype(jnp.bfloat16).astype(jnp.float32).reshape(1, Cin)
    wb = weight.astype(jnp.bfloat16).astype(jnp.float32)
    wsb = (wb * sb).astype(jnp.bfloat16).astype(jnp.float32)   # kernel scales in bf16
    ref_bf16 = (wsb @ xb).reshape(N, Cout, H, W)
    assert jnp.allclose(out, ref_bf16, atol=1e-3, rtol=1e-3)

    # Loose check against the original f32 module semantics; the only difference is
    # the bf16 rounding of the inputs (~1e-2 absolute at these magnitudes).
    ref_f32 = jnp.einsum("nchw,oc->nohw", x104 * x109, weight)
    assert jnp.allclose(out, ref_f32, atol=1e-1, rtol=1e-1)

    print("KERNEL_OK")
</pallas_src>

<mosaic_0001>
module attributes {stable_mosaic.version = 11 : i64} {
  func.func @_scale_conv1x1_kernel(%arg0: memref<1x640xbf16, #tpu.memory_space<vmem>>, %arg1: memref<160x640xbf16, #tpu.memory_space<vmem>>, %arg2: memref<640x196xbf16, #tpu.memory_space<vmem>>, %arg3: memref<160x196xf32, #tpu.memory_space<vmem>>) attributes {dimension_semantics = [], scalar_prefetch = 0 : i64, scratch_operands = 0 : i64, tpu.core_type = #tpu.core_type<tc>} {
    %c0 = arith.constant 0 : index
    %c0_0 = arith.constant 0 : index
    %0 = vector.load %arg1[%c0, %c0_0] : memref<160x640xbf16, #tpu.memory_space<vmem>>, vector<160x640xbf16>
    %c0_1 = arith.constant 0 : index
    %c0_2 = arith.constant 0 : index
    %1 = vector.load %arg0[%c0_1, %c0_2] : memref<1x640xbf16, #tpu.memory_space<vmem>>, vector<1x640xbf16>
    %2 = vector.broadcast %1 : vector<1x640xbf16> to vector<160x640xbf16>
    %3 = arith.mulf %0, %2 : vector<160x640xbf16>
    %c0_3 = arith.constant 0 : index
    %c0_4 = arith.constant 0 : index
    %4 = vector.load %arg2[%c0_3, %c0_4] : memref<640x196xbf16, #tpu.memory_space<vmem>>, vector<640x196xbf16>
    %cst = arith.constant dense<0.000000e+00> : vector<160x196xf32>
    %5 = tpu.matmul %3, %4, %cst {dimension_numbers = #tpu.dot_dimension_numbers<[1], [0], [0], [1], [0, 0, 1, 1], [], []>} : vector<160x640xbf16>, vector<640x196xbf16>, vector<160x196xf32> -> vector<160x196xf32>
    %c0_5 = arith.constant 0 : index
    %c0_6 = arith.constant 0 : index
    %6 = vector.load %arg3[%c0_5, %c0_6] : memref<160x196xf32, #tpu.memory_space<vmem>>, vector<160x196xf32>
    tpu.vector_store %arg3[%c0_5, %c0_6], %5 {strides = array<i32>} : memref<160x196xf32, #tpu.memory_space<vmem>>, vector<160x196xf32>,
    return
  }
}

</mosaic_0001>

<llo_original>
// kernel: tpu_custom_call.1
$region0: #{tpu_custom_call.1}
  #allocation0 [shape = 'u32[]', space=smem, size = 0x4, offset = 0x4, fixed_abs, tag = 'smem constant byte address 0x4 - core index']
  #allocation1 [shape = 'u32[72,128]{1,0:T(1,128)}', space=vmem, size = 0x9000, scoped, tag = 'internal scratch']
  %s0 = inlined_call_operand.vmem [shape: bf16[1,640], index: 0, kind: input, shape index: {}]
  %s1 = inlined_call_operand.vmem [shape: bf16[160,640], index: 1, kind: input, shape index: {}]
  %s2 = inlined_call_operand.vmem [shape: bf16[640,196], index: 2, kind: input, shape index: {}]
  %s3 = inlined_call_operand.hbm [shape: f32[160,196], index: 3, kind: output, shape index: {}]
  %s4 = sld [smem:[#allocation0]]
  $region22: #{tpu_custom_call.1} parent=0
    _
  %s6 = ssub.s32 1, %s4
  %s7 = scalar_select 0, %s6, %s4
  $region1: #{tpu_custom_call.1} parent=0
    #allocation2 [shape = 'u8[163840]{0}', space=vmem, size = 0x28000, scoped, tag = 'output window, operand 0, single buffered']
    #allocation3 [shape = 's32[1]{0}', space=sflag, size = 0x4, scoped, tag = 'scoped memory for tpu_custom_call.1']
    %8 = vsyncpa [#allocation3], 0
    // Predicated region
    $region2: #{tpu_custom_call.1} parent=1 // pred_check
      _
    $region3: #{tpu_custom_call.1} parent=1 // pred_check_branch
      %10 = sbr.rel (0) target = $region5
    $region4: #{tpu_custom_call.1} parent=1 // pred_region
      _
    $region5: #{tpu_custom_call.1} parent=1 // pred_fallthru
      _
    // Predicated region
    $region6: #{tpu_custom_call.1} parent=1 // pred_check
      _
    $region7: #{tpu_custom_call.1} parent=1 // pred_check_branch
      %12 = sbr.rel (0) target = $region9
    $region8: #{tpu_custom_call.1} parent=1 // pred_region
      _
    $region9: #{tpu_custom_call.1} parent=1 // pred_fallthru
      _
    // Predicated region
    $region10: #{tpu_custom_call.1} parent=1 // pred_check
      _
    $region11: #{tpu_custom_call.1} parent=1 // pred_check_branch
      %14 = sbr.rel (0) target = $region13
    $region12: #{tpu_custom_call.1} parent=1 // pred_region
      _
    $region13: #{tpu_custom_call.1} parent=1 // pred_fallthru
      _
    %v15 = vld [vmem:[%s1] sm:$0xff]
    %v16 = vld [vmem:[%s1 + $0x8] sm:$0xff]
    %v17 = vld [vmem:[%s1 + $0x10] sm:$0xf]
    %v18 = vld [vmem:[%s1 + $0x14] sm:$0xff]
    %v19 = vld [vmem:[%s1 + $0x1c] sm:$0xff]
    %v20 = vld [vmem:[%s1 + $0x24] sm:$0xf]
    %v21 = vld [vmem:[%s1 + $0x28] sm:$0xff]
    %v22 = vld [vmem:[%s1 + $0x30] sm:$0xff]
    %v23 = vld [vmem:[%s1 + $0x38] sm:$0xf]
    %v24 = vld [vmem:[%s1 + $0x3c] sm:$0xff]
    %v25 = vld [vmem:[%s1 + $0x44] sm:$0xff]
    %v26 = vld [vmem:[%s1 + $0x4c] sm:$0xf]
    %v27 = vld [vmem:[%s1 + $0x50] sm:$0xff]
    %v28 = vld [vmem:[%s1 + $0x58] sm:$0xff]
    %v29 = vld [vmem:[%s1 + $0x60] sm:$0xf]
    %v30 = vld [vmem:[%s1 + $0x64] sm:$0xff]
    %v31 = vld [vmem:[%s1 + $0x6c] sm:$0xff]
    %v32 = vld [vmem:[%s1 + $0x74] sm:$0xf]
    %v33 = vld [vmem:[%s1 + $0x78] sm:$0xff]
    %v34 = vld [vmem:[%s1 + $0x80] sm:$0xff]
    %v35 = vld [vmem:[%s1 + $0x88] sm:$0xf]
    %v36 = vld [vmem:[%s1 + $0x8c] sm:$0xff]
    %v37 = vld [vmem:[%s1 + $0x94] sm:$0xff]
    %v38 = vld [vmem:[%s1 + $0x9c] sm:$0xf]
    %v39 = vld [vmem:[%s1 + $0xa0] sm:$0xff]
    %v40 = vld [vmem:[%s1 + $0xa8] sm:$0xff]
    %v41 = vld [vmem:[%s1 + $0xb0] sm:$0xf]
    %v42 = vld [vmem:[%s1 + $0xb4] sm:$0xff]
    %v43 = vld [vmem:[%s1 + $0xbc] sm:$0xff]
    %v44 = vld [vmem:[%s1 + $0xc4] sm:$0xf]
    %v45 = vld [vmem:[%s1 + $0xc8] sm:$0xff]
    %v46 = vld [vmem:[%s1 + $0xd0] sm:$0xff]
    %v47 = vld [vmem:[%s1 + $0xd8] sm:$0xf]
    %v48 = vld [vmem:[%s1 + $0xdc] sm:$0xff]
    %v49 = vld [vmem:[%s1 + $0xe4] sm:$0xff]
    %v50 = vld [vmem:[%s1 + $0xec] sm:$0xf]
    %v51 = vld [vmem:[%s1 + $0xf0] sm:$0xff]
    %v52 = vld [vmem:[%s1 + $0xf8] sm:$0xff]
    %v53 = vld [vmem:[%s1 + $0x100] sm:$0xf]
    %v54 = vld [vmem:[%s1 + $0x104] sm:$0xff]
    %v55 = vld [vmem:[%s1 + $0x10c] sm:$0xff]
    %v56 = vld [vmem:[%s1 + $0x114] sm:$0xf]
    %v57 = vld [vmem:[%s1 + $0x118] sm:$0xff]
    %v58 = vld [vmem:[%s1 + $0x120] sm:$0xff]
    %v59 = vld [vmem:[%s1 + $0x128] sm:$0xf]
    %v60 = vld [vmem:[%s1 + $0x12c] sm:$0xff]
    %v61 = vld [vmem:[%s1 + $0x134] sm:$0xff]
    %v62 = vld [vmem:[%s1 + $0x13c] sm:$0xf]
    %v63 = vld [vmem:[%s1 + $0x140] sm:$0xff]
    %v64 = vld [vmem:[%s1 + $0x148] sm:$0xff]
    %v65 = vld [vmem:[%s1 + $0x150] sm:$0xf]
    %v66 = vld [vmem:[%s1 + $0x154] sm:$0xff]
    %v67 = vld [vmem:[%s1 + $0x15c] sm:$0xff]
    %v68 = vld [vmem:[%s1 + $0x164] sm:$0xf]
    %v69 = vld [vmem:[%s1 + $0x168] sm:$0xff]
    %v70 = vld [vmem:[%s1 + $0x170] sm:$0xff]
    %v71 = vld [vmem:[%s1 + $0x178] sm:$0xf]
    %v72 = vld [vmem:[%s1 + $0x17c] sm:$0xff]
    %v73 = vld [vmem:[%s1 + $0x184] sm:$0xff]
    %v74 = vld [vmem:[%s1 + $0x18c] sm:$0xf]
    %v75 = vld [vmem:[%s0] sm:$0x1f]
    %77 = vst [vmem:[#allocation1] ss:$9 sm:$0xff] %v75
    %v78 = vld [vmem:[#allocation1] sm:$0xff]
    %v79 = vld [vmem:[#allocation1 + $0x9] sm:$0xff]
    %v80 = vld [vmem:[#allocation1 + $0x12] sm:$0xff]
    %v81 = vld [vmem:[#allocation1 + $0x1b] sm:$0xff]
    %v82 = vld [vmem:[#allocation1 + $0x24] sm:$0xff]
    %v83 = vpack.i.b16 %v78, %v78
    %v85 = vperm.slane %v83, 0
    %v86 = vpack.i.b16 %v79, %v79
    %v88 = vperm.slane %v86, 0
    %v89 = vpack.i.b16 %v80, %v80
    %v91 = vperm.slane %v89, 0
    %v92 = vpack.i.b16 %v81, %v81
    %v94 = vperm.slane %v92, 0
    %v95 = vpack.i.b16 %v82, %v82
    %v97 = vperm.slane %v95, 0
    %v98 = vunpack.c.l.bf16 %v15
    %v99 = vunpack.c.h.bf16 %v15
    %v100 = vunpack.c.l.bf16 %v16
    %v101 = vunpack.c.h.bf16 %v16
    %v102 = vunpack.c.l.bf16 %v17
    %v103 = vunpack.c.l.bf16 %v18
    %v104 = vunpack.c.h.bf16 %v18
    %v105 = vunpack.c.l.bf16 %v19
    %v106 = vunpack.c.h.bf16 %v19
    %v107 = vunpack.c.l.bf16 %v20
    %v108 = vunpack.c.l.bf16 %v21
    %v109 = vunpack.c.h.bf16 %v21
    %v110 = vunpack.c.l.bf16 %v22
    %v111 = vunpack.c.h.bf16 %v22
    %v112 = vunpack.c.l.bf16 %v23
    %v113 = vunpack.c.l.bf16 %v24
    %v114 = vunpack.c.h.bf16 %v24
    %v115 = vunpack.c.l.bf16 %v25
    %v116 = vunpack.c.h.bf16 %v25
    %v117 = vunpack.c.l.bf16 %v26
    %v118 = vunpack.c.l.bf16 %v27
    %v119 = vunpack.c.h.bf16 %v27
    %v120 = vunpack.c.l.bf16 %v28
    %v121 = vunpack.c.h.bf16 %v28
    %v122 = vunpack.c.l.bf16 %v29
    %v123 = vunpack.c.l.bf16 %v30
    %v124 = vunpack.c.h.bf16 %v30
    %v125 = vunpack.c.l.bf16 %v31
    %v126 = vunpack.c.h.bf16 %v31
    %v127 = vunpack.c.l.bf16 %v32
    %v128 = vunpack.c.l.bf16 %v33
    %v129 = vunpack.c.h.bf16 %v33
    %v130 = vunpack.c.l.bf16 %v34
    %v131 = vunpack.c.h.bf16 %v34
    %v132 = vunpack.c.l.bf16 %v35
    %v133 = vunpack.c.l.bf16 %v36
    %v134 = vunpack.c.h.bf16 %v36
    %v135 = vunpack.c.l.bf16 %v37
    %v136 = vunpack.c.h.bf16 %v37
    %v137 = vunpack.c.l.bf16 %v38
    %v138 = vunpack.c.l.bf16 %v39
    %v139 = vunpack.c.h.bf16 %v39
    %v140 = vunpack.c.l.bf16 %v40
    %v141 = vunpack.c.h.bf16 %v40
    %v142 = vunpack.c.l.bf16 %v41
    %v143 = vunpack.c.l.bf16 %v42
    %v144 = vunpack.c.h.bf16 %v42
    %v145 = vunpack.c.l.bf16 %v43
    %v146 = vunpack.c.h.bf16 %v43
    %v147 = vunpack.c.l.bf16 %v44
    %v148 = vunpack.c.l.bf16 %v45
    %v149 = vunpack.c.h.bf16 %v45
    %v150 = vunpack.c.l.bf16 %v46
    %v151 = vunpack.c.h.bf16 %v46
    %v152 = vunpack.c.l.bf16 %v47
    %v153 = vunpack.c.l.bf16 %v48
    %v154 = vunpack.c.h.bf16 %v48
    %v155 = vunpack.c.l.bf16 %v49
    %v156 = vunpack.c.h.bf16 %v49
    %v157 = vunpack.c.l.bf16 %v50
    %v158 = vunpack.c.l.bf16 %v51
    %v159 = vunpack.c.h.bf16 %v51
    %v160 = vunpack.c.l.bf16 %v52
    %v161 = vunpack.c.h.bf16 %v52
    %v162 = vunpack.c.l.bf16 %v53
    %v163 = vunpack.c.l.bf16 %v54
    %v164 = vunpack.c.h.bf16 %v54
    %v165 = vunpack.c.l.bf16 %v55
    %v166 = vunpack.c.h.bf16 %v55
    %v167 = vunpack.c.l.bf16 %v56
    %v168 = vunpack.c.l.bf16 %v57
    %v169 = vunpack.c.h.bf16 %v57
    %v170 = vunpack.c.l.bf16 %v58
    %v171 = vunpack.c.h.bf16 %v58
    %v172 = vunpack.c.l.bf16 %v59
    %v173 = vunpack.c.l.bf16 %v60
    %v174 = vunpack.c.h.bf16 %v60
    %v175 = vunpack.c.l.bf16 %v61
    %v176 = vunpack.c.h.bf16 %v61
    %v177 = vunpack.c.l.bf16 %v62
    %v178 = vunpack.c.l.bf16 %v63
    %v179 = vunpack.c.h.bf16 %v63
    %v180 = vunpack.c.l.bf16 %v64
    %v181 = vunpack.c.h.bf16 %v64
    %v182 = vunpack.c.l.bf16 %v65
    %v183 = vunpack.c.l.bf16 %v66
    %v184 = vunpack.c.h.bf16 %v66
    %v185 = vunpack.c.l.bf16 %v67
    %v186 = vunpack.c.h.bf16 %v67
    %v187 = vunpack.c.l.bf16 %v68
    %v188 = vunpack.c.l.bf16 %v69
    %v189 = vunpack.c.h.bf16 %v69
    %v190 = vunpack.c.l.bf16 %v70
    %v191 = vunpack.c.h.bf16 %v70
    %v192 = vunpack.c.l.bf16 %v71
    %v193 = vunpack.c.l.bf16 %v72
    %v194 = vunpack.c.h.bf16 %v72
    %v195 = vunpack.c.l.bf16 %v73
    %v196 = vunpack.c.h.bf16 %v73
    %v197 = vunpack.c.l.bf16 %v74
    %v198 = vunpack.c.l.bf16 %v85
    %v199 = vunpack.c.l.bf16 %v88
    %v200 = vunpack.c.l.bf16 %v91
    %v201 = vunpack.c.l.bf16 %v94
    %v202 = vunpack.c.l.bf16 %v97
    %v203 = vmul.f32 %v98, %v198
    %v204 = vmul.f32 %v99, %v199
    %v205 = vmul.f32 %v100, %v200
    %v206 = vmul.f32 %v101, %v201
    %v207 = vmul.f32 %v102, %v202
    %v208 = vmul.f32 %v103, %v198
    %v209 = vmul.f32 %v104, %v199
    %v210 = vmul.f32 %v105, %v200
    %v211 = vmul.f32 %v106, %v201
    %v212 = vmul.f32 %v107, %v202
    %v213 = vmul.f32 %v108, %v198
    %v214 = vmul.f32 %v109, %v199
    %v215 = vmul.f32 %v110, %v200
    %v216 = vmul.f32 %v111, %v201
    %v217 = vmul.f32 %v112, %v202
    %v218 = vmul.f32 %v113, %v198
    %v219 = vmul.f32 %v114, %v199
    %v220 = vmul.f32 %v115, %v200
    %v221 = vmul.f32 %v116, %v201
    %v222 = vmul.f32 %v117, %v202
    %v223 = vmul.f32 %v118, %v198
    %v224 = vmul.f32 %v119, %v199
    %v225 = vmul.f32 %v120, %v200
    %v226 = vmul.f32 %v121, %v201
    %v227 = vmul.f32 %v122, %v202
    %v228 = vmul.f32 %v123, %v198
    %v229 = vmul.f32 %v124, %v199
    %v230 = vmul.f32 %v125, %v200
    %v231 = vmul.f32 %v126, %v201
    %v232 = vmul.f32 %v127, %v202
    %v233 = vmul.f32 %v128, %v198
    %v234 = vmul.f32 %v129, %v199
    %v235 = vmul.f32 %v130, %v200
    %v236 = vmul.f32 %v131, %v201
    %v237 = vmul.f32 %v132, %v202
    %v238 = vmul.f32 %v133, %v198
    %v239 = vmul.f32 %v134, %v199
    %v240 = vmul.f32 %v135, %v200
    %v241 = vmul.f32 %v136, %v201
    %v242 = vmul.f32 %v137, %v202
    %v243 = vmul.f32 %v138, %v198
    %v244 = vmul.f32 %v139, %v199
    %v245 = vmul.f32 %v140, %v200
    %v246 = vmul.f32 %v141, %v201
    %v247 = vmul.f32 %v142, %v202
    %v248 = vmul.f32 %v143, %v198
    %v249 = vmul.f32 %v144, %v199
    %v250 = vmul.f32 %v145, %v200
    %v251 = vmul.f32 %v146, %v201
    %v252 = vmul.f32 %v147, %v202
    %v253 = vmul.f32 %v148, %v198
    %v254 = vmul.f32 %v149, %v199
    %v255 = vmul.f32 %v150, %v200
    %v256 = vmul.f32 %v151, %v201
    %v257 = vmul.f32 %v152, %v202
    %v258 = vmul.f32 %v153, %v198
    %v259 = vmul.f32 %v154, %v199
    %v260 = vmul.f32 %v155, %v200
    %v261 = vmul.f32 %v156, %v201
    %v262 = vmul.f32 %v157, %v202
    %v263 = vmul.f32 %v158, %v198
    %v264 = vmul.f32 %v159, %v199
    %v265 = vmul.f32 %v160, %v200
    %v266 = vmul.f32 %v161, %v201
    %v267 = vmul.f32 %v162, %v202
    %v268 = vmul.f32 %v163, %v198
    %v269 = vmul.f32 %v164, %v199
    %v270 = vmul.f32 %v165, %v200
    %v271 = vmul.f32 %v166, %v201
    %v272 = vmul.f32 %v167, %v202
    %v273 = vmul.f32 %v168, %v198
    %v274 = vmul.f32 %v169, %v199
    %v275 = vmul.f32 %v170, %v200
    %v276 = vmul.f32 %v171, %v201
    %v277 = vmul.f32 %v172, %v202
    %v278 = vmul.f32 %v173, %v198
    %v279 = vmul.f32 %v174, %v199
    %v280 = vmul.f32 %v175, %v200
    %v281 = vmul.f32 %v176, %v201
    %v282 = vmul.f32 %v177, %v202
    %v283 = vmul.f32 %v178, %v198
    %v284 = vmul.f32 %v179, %v199
    %v285 = vmul.f32 %v180, %v200
    %v286 = vmul.f32 %v181, %v201
    %v287 = vmul.f32 %v182, %v202
    %v288 = vmul.f32 %v183, %v198
    %v289 = vmul.f32 %v184, %v199
    %v290 = vmul.f32 %v185, %v200
    %v291 = vmul.f32 %v186, %v201
    %v292 = vmul.f32 %v187, %v202
    %v293 = vmul.f32 %v188, %v198
    %v294 = vmul.f32 %v189, %v199
    %v295 = vmul.f32 %v190, %v200
    %v296 = vmul.f32 %v191, %v201
    %v297 = vmul.f32 %v192, %v202
    %v298 = vmul.f32 %v193, %v198
    %v299 = vmul.f32 %v194, %v199
    %v300 = vmul.f32 %v195, %v200
    %v301 = vmul.f32 %v196, %v201
    %v302 = vmul.f32 %v197, %v202
    %v303 = vpack.c.bf16 %v208, %v203
    %v304 = vpack.c.bf16 %v209, %v204
    %v305 = vpack.c.bf16 %v210, %v205
    %v306 = vpack.c.bf16 %v211, %v206
    %v307 = vpack.c.bf16 %v212, %v207
    %v308 = vpack.c.bf16 %v218, %v213
    %v309 = vpack.c.bf16 %v219, %v214
    %v310 = vpack.c.bf16 %v220, %v215
    %v311 = vpack.c.bf16 %v221, %v216
    %v312 = vpack.c.bf16 %v222, %v217
    %v313 = vpack.c.bf16 %v228, %v223
    %v314 = vpack.c.bf16 %v229, %v224
    %v315 = vpack.c.bf16 %v230, %v225
    %v316 = vpack.c.bf16 %v231, %v226
    %v317 = vpack.c.bf16 %v232, %v227
    %v318 = vpack.c.bf16 %v238, %v233
    %v319 = vpack.c.bf16 %v239, %v234
    %v320 = vpack.c.bf16 %v240, %v235
    %v321 = vpack.c.bf16 %v241, %v236
    %v322 = vpack.c.bf16 %v242, %v237
    %v323 = vpack.c.bf16 %v248, %v243
    %v324 = vpack.c.bf16 %v249, %v244
    %v325 = vpack.c.bf16 %v250, %v245
    %v326 = vpack.c.bf16 %v251, %v246
    %v327 = vpack.c.bf16 %v252, %v247
    %v328 = vpack.c.bf16 %v258, %v253
    %v329 = vpack.c.bf16 %v259, %v254
    %v330 = vpack.c.bf16 %v260, %v255
    %v331 = vpack.c.bf16 %v261, %v256
    %v332 = vpack.c.bf16 %v262, %v257
    %v333 = vpack.c.bf16 %v268, %v263
    %v334 = vpack.c.bf16 %v269, %v264
    %v335 = vpack.c.bf16 %v270, %v265
    %v336 = vpack.c.bf16 %v271, %v266
    %v337 = vpack.c.bf16 %v272, %v267
    %v338 = vpack.c.bf16 %v278, %v273
    %v339 = vpack.c.bf16 %v279, %v274
    %v340 = vpack.c.bf16 %v280, %v275
    %v341 = vpack.c.bf16 %v281, %v276
    %v342 = vpack.c.bf16 %v282, %v277
    %v343 = vpack.c.bf16 %v288, %v283
    %v344 = vpack.c.bf16 %v289, %v284
    %v345 = vpack.c.bf16 %v290, %v285
    %v346 = vpack.c.bf16 %v291, %v286
    %v347 = vpack.c.bf16 %v292, %v287
    %v348 = vpack.c.bf16 %v298, %v293
    %v349 = vpack.c.bf16 %v299, %v294
    %v350 = vpack.c.bf16 %v300, %v295
    %v351 = vpack.c.bf16 %v301, %v296
    %v352 = vpack.c.bf16 %v302, %v297
    %v353 = vld [vmem:[%s2] sm:$0xff]
    %v354 = vld [vmem:[%s2 + $0x8] sm:$0xff]
    %v355 = vld [vmem:[%s2 + $0x10] sm:$0xff]
    %v356 = vld [vmem:[%s2 + $0x18] sm:$0xff]
    %v357 = vld [vmem:[%s2 + $0x20] sm:$0xff]
    %v358 = vld [vmem:[%s2 + $0x28] sm:$0xff]
    %v359 = vld [vmem:[%s2 + $0x30] sm:$0xff]
    %v360 = vld [vmem:[%s2 + $0x38] sm:$0xff]
    %v361 = vld [vmem:[%s2 + $0x40] sm:$0xff]
    %v362 = vld [vmem:[%s2 + $0x48] sm:$0xff]
    %v363 = vld [vmem:[%s2 + $0x50] sm:$0xff]
    %v364 = vld [vmem:[%s2 + $0x58] sm:$0xff]
    %v365 = vld [vmem:[%s2 + $0x60] sm:$0xff]
    %v366 = vld [vmem:[%s2 + $0x68] sm:$0xff]
    %v367 = vld [vmem:[%s2 + $0x70] sm:$0xff]
    %v368 = vld [vmem:[%s2 + $0x78] sm:$0xff]
    %v369 = vld [vmem:[%s2 + $0x80] sm:$0xff]
    %v370 = vld [vmem:[%s2 + $0x88] sm:$0xff]
    %v371 = vld [vmem:[%s2 + $0x90] sm:$0xff]
    %v372 = vld [vmem:[%s2 + $0x98] sm:$0xff]
    %v373 = vld [vmem:[%s2 + $0xa0] sm:$0xff]
    %v374 = vld [vmem:[%s2 + $0xa8] sm:$0xff]
    %v375 = vld [vmem:[%s2 + $0xb0] sm:$0xff]
    %v376 = vld [vmem:[%s2 + $0xb8] sm:$0xff]
    %v377 = vld [vmem:[%s2 + $0xc0] sm:$0xff]
    %v378 = vld [vmem:[%s2 + $0xc8] sm:$0xff]
    %v379 = vld [vmem:[%s2 + $0xd0] sm:$0xff]
    %v380 = vld [vmem:[%s2 + $0xd8] sm:$0xff]
    %v381 = vld [vmem:[%s2 + $0xe0] sm:$0xff]
    %v382 = vld [vmem:[%s2 + $0xe8] sm:$0xff]
    %v383 = vld [vmem:[%s2 + $0xf0] sm:$0xff]
    %v384 = vld [vmem:[%s2 + $0xf8] sm:$0xff]
    %v385 = vld [vmem:[%s2 + $0x100] sm:$0xff]
    %v386 = vld [vmem:[%s2 + $0x108] sm:$0xff]
    %v387 = vld [vmem:[%s2 + $0x110] sm:$0xff]
    %v388 = vld [vmem:[%s2 + $0x118] sm:$0xff]
    %v389 = vld [vmem:[%s2 + $0x120] sm:$0xff]
    %v390 = vld [vmem:[%s2 + $0x128] sm:$0xff]
    %v391 = vld [vmem:[%s2 + $0x130] sm:$0xff]
    %v392 = vld [vmem:[%s2 + $0x138] sm:$0xff]
    %v393 = vld [vmem:[%s2 + $0x140] sm:$0xff]
    %v394 = vld [vmem:[%s2 + $0x148] sm:$0xff]
    %v395 = vld [vmem:[%s2 + $0x150] sm:$0xff]
    %v396 = vld [vmem:[%s2 + $0x158] sm:$0xff]
    %v397 = vld [vmem:[%s2 + $0x160] sm:$0xff]
    %v398 = vld [vmem:[%s2 + $0x168] sm:$0xff]
    %v399 = vld [vmem:[%s2 + $0x170] sm:$0xff]
    %v400 = vld [vmem:[%s2 + $0x178] sm:$0xff]
    %v401 = vld [vmem:[%s2 + $0x180] sm:$0xff]
    %v402 = vld [vmem:[%s2 + $0x188] sm:$0xff]
    %v403 = vld [vmem:[%s2 + $0x190] sm:$0xff]
    %v404 = vld [vmem:[%s2 + $0x198] sm:$0xff]
    %v405 = vld [vmem:[%s2 + $0x1a0] sm:$0xff]
    %v406 = vld [vmem:[%s2 + $0x1a8] sm:$0xff]
    %v407 = vld [vmem:[%s2 + $0x1b0] sm:$0xff]
    %v408 = vld [vmem:[%s2 + $0x1b8] sm:$0xff]
    %v409 = vld [vmem:[%s2 + $0x1c0] sm:$0xff]
    %v410 = vld [vmem:[%s2 + $0x1c8] sm:$0xff]
    %v411 = vld [vmem:[%s2 + $0x1d0] sm:$0xff]
    %v412 = vld [vmem:[%s2 + $0x1d8] sm:$0xff]
    %v413 = vld [vmem:[%s2 + $0x1e0] sm:$0xff]
    %v414 = vld [vmem:[%s2 + $0x1e8] sm:$0xff]
    %v415 = vld [vmem:[%s2 + $0x1f0] sm:$0xff]
    %v416 = vld [vmem:[%s2 + $0x1f8] sm:$0xff]
    %v417 = vld [vmem:[%s2 + $0x200] sm:$0xff]
    %v418 = vld [vmem:[%s2 + $0x208] sm:$0xff]
    %v419 = vld [vmem:[%s2 + $0x210] sm:$0xff]
    %v420 = vld [vmem:[%s2 + $0x218] sm:$0xff]
    %v421 = vld [vmem:[%s2 + $0x220] sm:$0xff]
    %v422 = vld [vmem:[%s2 + $0x228] sm:$0xff]
    %v423 = vld [vmem:[%s2 + $0x230] sm:$0xff]
    %v424 = vld [vmem:[%s2 + $0x238] sm:$0xff]
    %v425 = vld [vmem:[%s2 + $0x240] sm:$0xff]
    %v426 = vld [vmem:[%s2 + $0x248] sm:$0xff]
    %v427 = vld [vmem:[%s2 + $0x250] sm:$0xff]
    %v428 = vld [vmem:[%s2 + $0x258] sm:$0xff]
    %v429 = vld [vmem:[%s2 + $0x260] sm:$0xff]
    %v430 = vld [vmem:[%s2 + $0x268] sm:$0xff]
    %v431 = vld [vmem:[%s2 + $0x270] sm:$0xff]
    %v432 = vld [vmem:[%s2 + $0x278] sm:$0xff]
    %v513 = vunpack.c.l.b16 %v353
    %v514 = vunpack.c.h.b16 %v353
    %v515 = vunpack.c.l.b16 %v354
    %v516 = vunpack.c.h.b16 %v354
    %v517 = vunpack.c.l.b16 %v355
    %v518 = vunpack.c.h.b16 %v355
    %v519 = vunpack.c.l.b16 %v356
    %v520 = vunpack.c.h.b16 %v356
    %v521 = vunpack.c.l.b16 %v357
    %v522 = vunpack.c.h.b16 %v357
    %v523 = vunpack.c.l.b16 %v358
    %v524 = vunpack.c.h.b16 %v358
    %v525 = vunpack.c.l.b16 %v359
    %v526 = vunpack.c.h.b16 %v359
    %v527 = vunpack.c.l.b16 %v360
    %v528 = vunpack.c.h.b16 %v360
    %v529 = vunpack.c.l.b16 %v361
    %v530 = vunpack.c.h.b16 %v361
    %v531 = vunpack.c.l.b16 %v362
    %v532 = vunpack.c.h.b16 %v362
    %v533 = vunpack.c.l.b16 %v363
    %v534 = vunpack.c.h.b16 %v363
    %v535 = vunpack.c.l.b16 %v364
    %v536 = vunpack.c.h.b16 %v364
    %v537 = vunpack.c.l.b16 %v365
    %v538 = vunpack.c.h.b16 %v365
    %v539 = vunpack.c.l.b16 %v366
    %v540 = vunpack.c.h.b16 %v366
    %v541 = vunpack.c.l.b16 %v367
    %v542 = vunpack.c.h.b16 %v367
    %v543 = vunpack.c.l.b16 %v368
    %v544 = vunpack.c.h.b16 %v368
    %v545 = vunpack.c.l.b16 %v369
    %v546 = vunpack.c.h.b16 %v369
    %v547 = vunpack.c.l.b16 %v370
    %v548 = vunpack.c.h.b16 %v370
    %v549 = vunpack.c.l.b16 %v371
    %v550 = vunpack.c.h.b16 %v371
    %v551 = vunpack.c.l.b16 %v372
    %v552 = vunpack.c.h.b16 %v372
    %v553 = vunpack.c.l.b16 %v373
    %v554 = vunpack.c.h.b16 %v373
    %v555 = vunpack.c.l.b16 %v374
    %v556 = vunpack.c.h.b16 %v374
    %v557 = vunpack.c.l.b16 %v375
    %v558 = vunpack.c.h.b16 %v375
    %v559 = vunpack.c.l.b16 %v376
    %v560 = vunpack.c.h.b16 %v376
    %v561 = vunpack.c.l.b16 %v377
    %v562 = vunpack.c.h.b16 %v377
    %v563 = vunpack.c.l.b16 %v378
    %v564 = vunpack.c.h.b16 %v378
    %v565 = vunpack.c.l.b16 %v379
    %v566 = vunpack.c.h.b16 %v379
    %v567 = vunpack.c.l.b16 %v380
    %v568 = vunpack.c.h.b16 %v380
    %v569 = vunpack.c.l.b16 %v381
    %v570 = vunpack.c.h.b16 %v381
    %v571 = vunpack.c.l.b16 %v382
    %v572 = vunpack.c.h.b16 %v382
    %v573 = vunpack.c.l.b16 %v383
    %v574 = vunpack.c.h.b16 %v383
    %v575 = vunpack.c.l.b16 %v384
    %v576 = vunpack.c.h.b16 %v384
    %v577 = vunpack.c.l.b16 %v385
    %v578 = vunpack.c.h.b16 %v385
    %v579 = vunpack.c.l.b16 %v386
    %v580 = vunpack.c.h.b16 %v386
    %v581 = vunpack.c.l.b16 %v387
    %v582 = vunpack.c.h.b16 %v387
    %v583 = vunpack.c.l.b16 %v388
    %v584 = vunpack.c.h.b16 %v388
    %v585 = vunpack.c.l.b16 %v389
    %v586 = vunpack.c.h.b16 %v389
    %v587 = vunpack.c.l.b16 %v390
    %v588 = vunpack.c.h.b16 %v390
    %v589 = vunpack.c.l.b16 %v391
    %v590 = vunpack.c.h.b16 %v391
    %v591 = vunpack.c.l.b16 %v392
    %v592 = vunpack.c.h.b16 %v392
    %v593 = vunpack.c.l.b16 %v393
    %v594 = vunpack.c.h.b16 %v393
    %v595 = vunpack.c.l.b16 %v394
    %v596 = vunpack.c.h.b16 %v394
    %v597 = vunpack.c.l.b16 %v395
    %v598 = vunpack.c.h.b16 %v395
    %v599 = vunpack.c.l.b16 %v396
    %v600 = vunpack.c.h.b16 %v396
    %v601 = vunpack.c.l.b16 %v397
    %v602 = vunpack.c.h.b16 %v397
    %v603 = vunpack.c.l.b16 %v398
    %v604 = vunpack.c.h.b16 %v398
    %v605 = vunpack.c.l.b16 %v399
    %v606 = vunpack.c.h.b16 %v399
    %v607 = vunpack.c.l.b16 %v400
    %v608 = vunpack.c.h.b16 %v400
    %v609 = vunpack.c.l.b16 %v401
    %v610 = vunpack.c.h.b16 %v401
    %v611 = vunpack.c.l.b16 %v402
    %v612 = vunpack.c.h.b16 %v402
    %v613 = vunpack.c.l.b16 %v403
    %v614 = vunpack.c.h.b16 %v403
    %v615 = vunpack.c.l.b16 %v404
    %v616 = vunpack.c.h.b16 %v404
    %v617 = vunpack.c.l.b16 %v405
    %v618 = vunpack.c.h.b16 %v405
    %v619 = vunpack.c.l.b16 %v406
    %v620 = vunpack.c.h.b16 %v406
    %v621 = vunpack.c.l.b16 %v407
    %v622 = vunpack.c.h.b16 %v407
    %v623 = vunpack.c.l.b16 %v408
    %v624 = vunpack.c.h.b16 %v408
    %v625 = vunpack.c.l.b16 %v409
    %v626 = vunpack.c.h.b16 %v409
    %v627 = vunpack.c.l.b16 %v410
    %v628 = vunpack.c.h.b16 %v410
    %v629 = vunpack.c.l.b16 %v411
    %v630 = vunpack.c.h.b16 %v411
    %v631 = vunpack.c.l.b16 %v412
    %v632 = vunpack.c.h.b16 %v412
    %v633 = vunpack.c.l.b16 %v413
    %v634 = vunpack.c.h.b16 %v413
    %v635 = vunpack.c.l.b16 %v414
    %v636 = vunpack.c.h.b16 %v414
    %v637 = vunpack.c.l.b16 %v415
    %v638 = vunpack.c.h.b16 %v415
    %v639 = vunpack.c.l.b16 %v416
    %v640 = vunpack.c.h.b16 %v416
    %v641 = vunpack.c.l.b16 %v417
    %v642 = vunpack.c.h.b16 %v417
    %v643 = vunpack.c.l.b16 %v418
    %v644 = vunpack.c.h.b16 %v418
    %v645 = vunpack.c.l.b16 %v419
    %v646 = vunpack.c.h.b16 %v419
    %v647 = vunpack.c.l.b16 %v420
    %v648 = vunpack.c.h.b16 %v420
    %v649 = vunpack.c.l.b16 %v421
    %v650 = vunpack.c.h.b16 %v421
    %v651 = vunpack.c.l.b16 %v422
    %v652 = vunpack.c.h.b16 %v422
    %v653 = vunpack.c.l.b16 %v423
    %v654 = vunpack.c.h.b16 %v423
    %v655 = vunpack.c.l.b16 %v424
    %v656 = vunpack.c.h.b16 %v424
    %v657 = vunpack.c.l.b16 %v425
    %v658 = vunpack.c.h.b16 %v425
    %v659 = vunpack.c.l.b16 %v426
    %v660 = vunpack.c.h.b16 %v426
    %v661 = vunpack.c.l.b16 %v427
    %v662 = vunpack.c.h.b16 %v427
    %v663 = vunpack.c.l.b16 %v428
    %v664 = vunpack.c.h.b16 %v428
    %v665 = vunpack.c.l.b16 %v429
    %v666 = vunpack.c.h.b16 %v429
    %v667 = vunpack.c.l.b16 %v430
    %v668 = vunpack.c.h.b16 %v430
    %v669 = vunpack.c.l.b16 %v431
    %v670 = vunpack.c.h.b16 %v431
    %v671 = vunpack.c.l.b16 %v432
    %v672 = vunpack.c.h.b16 %v432
    %v673 = vpack.c.b16 %v515, %v513
    %v674 = vpack.c.b16 %v516, %v514
    %v675 = vpack.c.b16 %v519, %v517
    %v676 = vpack.c.b16 %v520, %v518
    %v677 = vpack.c.b16 %v523, %v521
    %v678 = vpack.c.b16 %v524, %v522
    %v679 = vpack.c.b16 %v527, %v525
    %v680 = vpack.c.b16 %v528, %v526
    %v681 = vpack.c.b16 %v531, %v529
    %v682 = vpack.c.b16 %v532, %v530
    %v683 = vpack.c.b16 %v535, %v533
    %v684 = vpack.c.b16 %v536, %v534
    %v685 = vpack.c.b16 %v539, %v537
    %v686 = vpack.c.b16 %v540, %v538
    %v687 = vpack.c.b16 %v543, %v541
    %v688 = vpack.c.b16 %v544, %v542
    %v689 = vpack.c.b16 %v547, %v545
    %v690 = vpack.c.b16 %v548, %v546
    %v691 = vpack.c.b16 %v551, %v549
    %v692 = vpack.c.b16 %v552, %v550
    %v693 = vpack.c.b16 %v555, %v553
    %v694 = vpack.c.b16 %v556, %v554
    %v695 = vpack.c.b16 %v559, %v557
    %v696 = vpack.c.b16 %v560, %v558
    %v697 = vpack.c.b16 %v563, %v561
    %v698 = vpack.c.b16 %v564, %v562
    %v699 = vpack.c.b16 %v567, %v565
    %v700 = vpack.c.b16 %v568, %v566
    %v701 = vpack.c.b16 %v571, %v569
    %v702 = vpack.c.b16 %v572, %v570
    %v703 = vpack.c.b16 %v575, %v573
    %v704 = vpack.c.b16 %v576, %v574
    %v705 = vpack.c.b16 %v579, %v577
    %v706 = vpack.c.b16 %v580, %v578
    %v707 = vpack.c.b16 %v583, %v581
    %v708 = vpack.c.b16 %v584, %v582
    %v709 = vpack.c.b16 %v587, %v585
    %v710 = vpack.c.b16 %v588, %v586
    %v711 = vpack.c.b16 %v591, %v589
    %v712 = vpack.c.b16 %v592, %v590
    %v713 = vpack.c.b16 %v595, %v593
    %v714 = vpack.c.b16 %v596, %v594
    %v715 = vpack.c.b16 %v599, %v597
    %v716 = vpack.c.b16 %v600, %v598
    %v717 = vpack.c.b16 %v603, %v601
    %v718 = vpack.c.b16 %v604, %v602
    %v719 = vpack.c.b16 %v607, %v605
    %v720 = vpack.c.b16 %v608, %v606
    %v721 = vpack.c.b16 %v611, %v609
    %v722 = vpack.c.b16 %v612, %v610
    %v723 = vpack.c.b16 %v615, %v613
    %v724 = vpack.c.b16 %v616, %v614
    %v725 = vpack.c.b16 %v619, %v617
    %v726 = vpack.c.b16 %v620, %v618
    %v727 = vpack.c.b16 %v623, %v621
    %v728 = vpack.c.b16 %v624, %v622
    %v729 = vpack.c.b16 %v627, %v625
    %v730 = vpack.c.b16 %v628, %v626
    %v731 = vpack.c.b16 %v631, %v629
    %v732 = vpack.c.b16 %v632, %v630
    %v733 = vpack.c.b16 %v635, %v633
    %v734 = vpack.c.b16 %v636, %v634
    %v735 = vpack.c.b16 %v639, %v637
    %v736 = vpack.c.b16 %v640, %v638
    %v737 = vpack.c.b16 %v643, %v641
    %v738 = vpack.c.b16 %v644, %v642
    %v739 = vpack.c.b16 %v647, %v645
    %v740 = vpack.c.b16 %v648, %v646
    %v741 = vpack.c.b16 %v651, %v649
    %v742 = vpack.c.b16 %v652, %v650
    %v743 = vpack.c.b16 %v655, %v653
    %v744 = vpack.c.b16 %v656, %v654
    %v745 = vpack.c.b16 %v659, %v657
    %v746 = vpack.c.b16 %v660, %v658
    %v747 = vpack.c.b16 %v663, %v661
    %v748 = vpack.c.b16 %v664, %v662
    %v749 = vpack.c.b16 %v667, %v665
    %v750 = vpack.c.b16 %v668, %v666
    %v751 = vpack.c.b16 %v671, %v669
    %v752 = vpack.c.b16 %v672, %v670
    %833 = vmatpush.bf16.msra.mxu0 %v687
    %834 = vmatpush.bf16.msra.mxu0 %v685
    %835 = vmatpush.bf16.msra.mxu0 %v683
    %836 = vmatpush.bf16.msra.mxu0 %v681
    %837 = vmatpush.bf16.msra.mxu0 %v679
    %838 = vmatpush.bf16.msra.mxu0 %v677
    %839 = vmatpush.bf16.msra.mxu0 %v675
    %840 = vmatpush.bf16.msra.mxu0 %v673
    %841 = vmatmul.bf16.gmra.mxu0 %v303
    %v842 = vpop.f32.mrf.mxu0
    %v843 = vadd.f32 0.0, %v842
    %v844 = vpop.f32.mrf.mxu0
    %v845 = vadd.f32 0.0, %v844
    %846 = vmatmul.bf16.gmra.mxu0 %v308
    %v847 = vpop.f32.mrf.mxu0
    %v848 = vadd.f32 0.0, %v847
    %v849 = vpop.f32.mrf.mxu0
    %v850 = vadd.f32 0.0, %v849
    %851 = vmatmul.bf16.gmra.mxu0 %v313
    %v852 = vpop.f32.mrf.mxu0
    %v853 = vadd.f32 0.0, %v852
    %v854 = vpop.f32.mrf.mxu0
    %v855 = vadd.f32 0.0, %v854
    %856 = vmatmul.bf16.gmra.mxu0 %v318
    %v857 = vpop.f32.mrf.mxu0
    %v858 = vadd.f32 0.0, %v857
    %v859 = vpop.f32.mrf.mxu0
    %v860 = vadd.f32 0.0, %v859
    %861 = vmatmul.bf16.gmra.mxu0 %v323
    %v862 = vpop.f32.mrf.mxu0
    %v863 = vadd.f32 0.0, %v862
    %v864 = vpop.f32.mrf.mxu0
    %v865 = vadd.f32 0.0, %v864
    %866 = vmatmul.bf16.gmra.mxu0 %v328
    %v867 = vpop.f32.mrf.mxu0
    %v868 = vadd.f32 0.0, %v867
    %v869 = vpop.f32.mrf.mxu0
    %v870 = vadd.f32 0.0, %v869
    %871 = vmatmul.bf16.gmra.mxu0 %v333
    %v872 = vpop.f32.mrf.mxu0
    %v873 = vadd.f32 0.0, %v872
    %v874 = vpop.f32.mrf.mxu0
    %v875 = vadd.f32 0.0, %v874
    %876 = vmatmul.bf16.gmra.mxu0 %v338
    %v877 = vpop.f32.mrf.mxu0
    %v878 = vadd.f32 0.0, %v877
    %v879 = vpop.f32.mrf.mxu0
    %v880 = vadd.f32 0.0, %v879
    %881 = vmatmul.bf16.gmra.mxu0 %v343
    %v882 = vpop.f32.mrf.mxu0
    %v883 = vadd.f32 0.0, %v882
    %v884 = vpop.f32.mrf.mxu0
    %v885 = vadd.f32 0.0, %v884
    %886 = vmatmul.bf16.gmra.mxu0 %v348
    %v887 = vpop.f32.mrf.mxu0
    %v888 = vadd.f32 0.0, %v887
    %v889 = vpop.f32.mrf.mxu0
    %v890 = vadd.f32 0.0, %v889
    %891 = vdwg.mxu0
    %892 = vmatpush.bf16.msra.mxu0 %v703
    %893 = vmatpush.bf16.msra.mxu0 %v701
    %894 = vmatpush.bf16.msra.mxu0 %v699
    %895 = vmatpush.bf16.msra.mxu0 %v697
    %896 = vmatpush.bf16.msra.mxu0 %v695
    %897 = vmatpush.bf16.msra.mxu0 %v693
    %898 = vmatpush.bf16.msra.mxu0 %v691
    %899 = vmatpush.bf16.msra.mxu0 %v689
    %900 = vmatmul.bf16.gmra.mxu0 %v304
    %v901 = vpop.f32.mrf.mxu0
    %v902 = vadd.f32 %v843, %v901
    %v903 = vpop.f32.mrf.mxu0
    %v904 = vadd.f32 %v845, %v903
    %905 = vmatmul.bf16.gmra.mxu0 %v309
    %v906 = vpop.f32.mrf.mxu0
    %v907 = vadd.f32 %v848, %v906
    %v908 = vpop.f32.mrf.mxu0
    %v909 = vadd.f32 %v850, %v908
    %910 = vmatmul.bf16.gmra.mxu0 %v314
    %v911 = vpop.f32.mrf.mxu0
    %v912 = vadd.f32 %v853, %v911
    %v913 = vpop.f32.mrf.mxu0
    %v914 = vadd.f32 %v855, %v913
    %915 = vmatmul.bf16.gmra.mxu0 %v319
    %v916 = vpop.f32.mrf.mxu0
    %v917 = vadd.f32 %v858, %v916
    %v918 = vpop.f32.mrf.mxu0
    %v919 = vadd.f32 %v860, %v918
    %920 = vmatmul.bf16.gmra.mxu0 %v324
    %v921 = vpop.f32.mrf.mxu0
    %v922 = vadd.f32 %v863, %v921
    %v923 = vpop.f32.mrf.mxu0
    %v924 = vadd.f32 %v865, %v923
    %925 = vmatmul.bf16.gmra.mxu0 %v329
    %v926 = vpop.f32.mrf.mxu0
    %v927 = vadd.f32 %v868, %v926
    %v928 = vpop.f32.mrf.mxu0
    %v929 = vadd.f32 %v870, %v928
    %930 = vmatmul.bf16.gmra.mxu0 %v334
    %v931 = vpop.f32.mrf.mxu0
    %v932 = vadd.f32 %v873, %v931
    %v933 = vpop.f32.mrf.mxu0
    %v934 = vadd.f32 %v875, %v933
    %935 = vmatmul.bf16.gmra.mxu0 %v339
    %v936 = vpop.f32.mrf.mxu0
    %v937 = vadd.f32 %v878, %v936
    %v938 = vpop.f32.mrf.mxu0
    %v939 = vadd.f32 %v880, %v938
    %940 = vmatmul.bf16.gmra.mxu0 %v344
    %v941 = vpop.f32.mrf.mxu0
    %v942 = vadd.f32 %v883, %v941
    %v943 = vpop.f32.mrf.mxu0
    %v944 = vadd.f32 %v885, %v943
    %945 = vmatmul.bf16.gmra.mxu0 %v349
    %v946 = vpop.f32.mrf.mxu0
    %v947 = vadd.f32 %v888, %v946
    %v948 = vpop.f32.mrf.mxu0
    %v949 = vadd.f32 %v890, %v948
    %950 = vdwg.mxu0
    %951 = vmatpush.bf16.msra.mxu0 %v719
    %952 = vmatpush.bf16.msra.mxu0 %v717
    %953 = vmatpush.bf16.msra.mxu0 %v715
    %954 = vmatpush.bf16.msra.mxu0 %v713
    %955 = vmatpush.bf16.msra.mxu0 %v711
    %956 = vmatpush.bf16.msra.mxu0 %v709
    %957 = vmatpush.bf16.msra.mxu0 %v707
    %958 = vmatpush.bf16.msra.mxu0 %v705
    %959 = vmatmul.bf16.gmra.mxu0 %v305
    %v960 = vpop.f32.mrf.mxu0
    %v961 = vadd.f32 %v902, %v960
    %v962 = vpop.f32.mrf.mxu0
    %v963 = vadd.f32 %v904, %v962
    %964 = vmatmul.bf16.gmra.mxu0 %v310
    %v965 = vpop.f32.mrf.mxu0
    %v966 = vadd.f32 %v907, %v965
    %v967 = vpop.f32.mrf.mxu0
    %v968 = vadd.f32 %v909, %v967
    %969 = vmatmul.bf16.gmra.mxu0 %v315
    %v970 = vpop.f32.mrf.mxu0
    %v971 = vadd.f32 %v912, %v970
    %v972 = vpop.f32.mrf.mxu0
    %v973 = vadd.f32 %v914, %v972
    %974 = vmatmul.bf16.gmra.mxu0 %v320
    %v975 = vpop.f32.mrf.mxu0
    %v976 = vadd.f32 %v917, %v975
    %v977 = vpop.f32.mrf.mxu0
    %v978 = vadd.f32 %v919, %v977
    %979 = vmatmul.bf16.gmra.mxu0 %v325
    %v980 = vpop.f32.mrf.mxu0
    %v981 = vadd.f32 %v922, %v980
    %v982 = vpop.f32.mrf.mxu0
    %v983 = vadd.f32 %v924, %v982
    %984 = vmatmul.bf16.gmra.mxu0 %v330
    %v985 = vpop.f32.mrf.mxu0
    %v986 = vadd.f32 %v927, %v985
    %v987 = vpop.f32.mrf.mxu0
    %v988 = vadd.f32 %v929, %v987
    %989 = vmatmul.bf16.gmra.mxu0 %v335
    %v990 = vpop.f32.mrf.mxu0
    %v991 = vadd.f32 %v932, %v990
    %v992 = vpop.f32.mrf.mxu0
    %v993 = vadd.f32 %v934, %v992
    %994 = vmatmul.bf16.gmra.mxu0 %v340
    %v995 = vpop.f32.mrf.mxu0
    %v996 = vadd.f32 %v937, %v995
    %v997 = vpop.f32.mrf.mxu0
    %v998 = vadd.f32 %v939, %v997
    %999 = vmatmul.bf16.gmra.mxu0 %v345
    %v1000 = vpop.f32.mrf.mxu0
    %v1001 = vadd.f32 %v942, %v1000
    %v1002 = vpop.f32.mrf.mxu0
    %v1003 = vadd.f32 %v944, %v1002
    %1004 = vmatmul.bf16.gmra.mxu0 %v350
    %v1005 = vpop.f32.mrf.mxu0
    %v1006 = vadd.f32 %v947, %v1005
    %v1007 = vpop.f32.mrf.mxu0
    %v1008 = vadd.f32 %v949, %v1007
    %1009 = vdwg.mxu0
    %1010 = vmatpush.bf16.msra.mxu0 %v735
    %1011 = vmatpush.bf16.msra.mxu0 %v733
    %1012 = vmatpush.bf16.msra.mxu0 %v731
    %1013 = vmatpush.bf16.msra.mxu0 %v729
    %1014 = vmatpush.bf16.msra.mxu0 %v727
    %1015 = vmatpush.bf16.msra.mxu0 %v725
    %1016 = vmatpush.bf16.msra.mxu0 %v723
    %1017 = vmatpush.bf16.msra.mxu0 %v721
    %1018 = vmatmul.bf16.gmra.mxu0 %v306
    %v1019 = vpop.f32.mrf.mxu0
    %v1020 = vadd.f32 %v961, %v1019
    %v1021 = vpop.f32.mrf.mxu0
    %v1022 = vadd.f32 %v963, %v1021
    %1023 = vmatmul.bf16.gmra.mxu0 %v311
    %v1024 = vpop.f32.mrf.mxu0
    %v1025 = vadd.f32 %v966, %v1024
    %v1026 = vpop.f32.mrf.mxu0
    %v1027 = vadd.f32 %v968, %v1026
    %1028 = vmatmul.bf16.gmra.mxu0 %v316
    %v1029 = vpop.f32.mrf.mxu0
    %v1030 = vadd.f32 %v971, %v1029
    %v1031 = vpop.f32.mrf.mxu0
    %v1032 = vadd.f32 %v973, %v1031
    %1033 = vmatmul.bf16.gmra.mxu0 %v321
    %v1034 = vpop.f32.mrf.mxu0
    %v1035 = vadd.f32 %v976, %v1034
    %v1036 = vpop.f32.mrf.mxu0
    %v1037 = vadd.f32 %v978, %v1036
    %1038 = vmatmul.bf16.gmra.mxu0 %v326
    %v1039 = vpop.f32.mrf.mxu0
    %v1040 = vadd.f32 %v981, %v1039
    %v1041 = vpop.f32.mrf.mxu0
    %v1042 = vadd.f32 %v983, %v1041
    %1043 = vmatmul.bf16.gmra.mxu0 %v331
    %v1044 = vpop.f32.mrf.mxu0
    %v1045 = vadd.f32 %v986, %v1044
    %v1046 = vpop.f32.mrf.mxu0
    %v1047 = vadd.f32 %v988, %v1046
    %1048 = vmatmul.bf16.gmra.mxu0 %v336
    %v1049 = vpop.f32.mrf.mxu0
    %v1050 = vadd.f32 %v991, %v1049
    %v1051 = vpop.f32.mrf.mxu0
    %v1052 = vadd.f32 %v993, %v1051
    %1053 = vmatmul.bf16.gmra.mxu0 %v341
    %v1054 = vpop.f32.mrf.mxu0
    %v1055 = vadd.f32 %v996, %v1054
    %v1056 = vpop.f32.mrf.mxu0
    %v1057 = vadd.f32 %v998, %v1056
    %1058 = vmatmul.bf16.gmra.mxu0 %v346
    %v1059 = vpop.f32.mrf.mxu0
    %v1060 = vadd.f32 %v1001, %v1059
    %v1061 = vpop.f32.mrf.mxu0
    %v1062 = vadd.f32 %v1003, %v1061
    %1063 = vmatmul.bf16.gmra.mxu0 %v351
    %v1064 = vpop.f32.mrf.mxu0
    %v1065 = vadd.f32 %v1006, %v1064
    %v1066 = vpop.f32.mrf.mxu0
    %v1067 = vadd.f32 %v1008, %v1066
    %1068 = vdwg.mxu0
    %1069 = vmatpush.bf16.msra.mxu0 %v751
    %1070 = vmatpush.bf16.msra.mxu0 %v749
    %1071 = vmatpush.bf16.msra.mxu0 %v747
    %1072 = vmatpush.bf16.msra.mxu0 %v745
    %1073 = vmatpush.bf16.msra.mxu0 %v743
    %1074 = vmatpush.bf16.msra.mxu0 %v741
    %1075 = vmatpush.bf16.msra.mxu0 %v739
    %1076 = vmatpush.bf16.msra.mxu0 %v737
    %1077 = vmatmul.bf16.gmra.mxu0 %v307
    %v1078 = vpop.f32.mrf.mxu0
    %v1079 = vadd.f32 %v1020, %v1078
    %v1080 = vpop.f32.mrf.mxu0
    %v1081 = vadd.f32 %v1022, %v1080
    %1082 = vmatmul.bf16.gmra.mxu0 %v312
    %v1083 = vpop.f32.mrf.mxu0
    %v1084 = vadd.f32 %v1025, %v1083
    %v1085 = vpop.f32.mrf.mxu0
    %v1086 = vadd.f32 %v1027, %v1085
    %1087 = vmatmul.bf16.gmra.mxu0 %v317
    %v1088 = vpop.f32.mrf.mxu0
    %v1089 = vadd.f32 %v1030, %v1088
    %v1090 = vpop.f32.mrf.mxu0
    %v1091 = vadd.f32 %v1032, %v1090
    %1092 = vmatmul.bf16.gmra.mxu0 %v322
    %v1093 = vpop.f32.mrf.mxu0
    %v1094 = vadd.f32 %v1035, %v1093
    %v1095 = vpop.f32.mrf.mxu0
    %v1096 = vadd.f32 %v1037, %v1095
    %1097 = vmatmul.bf16.gmra.mxu0 %v327
    %v1098 = vpop.f32.mrf.mxu0
    %v1099 = vadd.f32 %v1040, %v1098
    %v1100 = vpop.f32.mrf.mxu0
    %v1101 = vadd.f32 %v1042, %v1100
    %1102 = vmatmul.bf16.gmra.mxu0 %v332
    %v1103 = vpop.f32.mrf.mxu0
    %v1104 = vadd.f32 %v1045, %v1103
    %v1105 = vpop.f32.mrf.mxu0
    %v1106 = vadd.f32 %v1047, %v1105
    %1107 = vmatmul.bf16.gmra.mxu0 %v337
    %v1108 = vpop.f32.mrf.mxu0
    %v1109 = vadd.f32 %v1050, %v1108
    %v1110 = vpop.f32.mrf.mxu0
    %v1111 = vadd.f32 %v1052, %v1110
    %1112 = vmatmul.bf16.gmra.mxu0 %v342
    %v1113 = vpop.f32.mrf.mxu0
    %v1114 = vadd.f32 %v1055, %v1113
    %v1115 = vpop.f32.mrf.mxu0
    %v1116 = vadd.f32 %v1057, %v1115
    %1117 = vmatmul.bf16.gmra.mxu0 %v347
    %v1118 = vpop.f32.mrf.mxu0
    %v1119 = vadd.f32 %v1060, %v1118
    %v1120 = vpop.f32.mrf.mxu0
    %v1121 = vadd.f32 %v1062, %v1120
    %1122 = vmatmul.bf16.gmra.mxu0 %v352
    %v1123 = vpop.f32.mrf.mxu0
    %v1124 = vadd.f32 %v1065, %v1123
    %v1125 = vpop.f32.mrf.mxu0
    %v1126 = vadd.f32 %v1067, %v1125
    %1127 = vdwg.mxu0
    %1128 = vmatpush.bf16.msra.mxu0 %v688
    %1129 = vmatpush.bf16.msra.mxu0 %v686
    %1130 = vmatpush.bf16.msra.mxu0 %v684
    %1131 = vmatpush.bf16.msra.mxu0 %v682
    %1132 = vmatpush.bf16.msra.mxu0 %v680
    %1133 = vmatpush.bf16.msra.mxu0 %v678
    %1134 = vmatpush.bf16.msra.mxu0 %v676
    %1135 = vmatpush.bf16.msra.mxu0 %v674
    %1136 = vmatmul.bf16.gmra.mxu0 %v303
    %v1137 = vpop.f32.mrf.mxu0
    %v1138 = vadd.f32 0.0, %v1137
    %v1139 = vpop.f32.mrf.mxu0
    %v1140 = vadd.f32 0.0, %v1139
    %1141 = vmatmul.bf16.gmra.mxu0 %v308
    %v1142 = vpop.f32.mrf.mxu0
    %v1143 = vadd.f32 0.0, %v1142
    %v1144 = vpop.f32.mrf.mxu0
    %v1145 = vadd.f32 0.0, %v1144
    %1146 = vmatmul.bf16.gmra.mxu0 %v313
    %v1147 = vpop.f32.mrf.mxu0
    %v1148 = vadd.f32 0.0, %v1147
    %v1149 = vpop.f32.mrf.mxu0
    %v1150 = vadd.f32 0.0, %v1149
    %1151 = vmatmul.bf16.gmra.mxu0 %v318
    %v1152 = vpop.f32.mrf.mxu0
    %v1153 = vadd.f32 0.0, %v1152
    %v1154 = vpop.f32.mrf.mxu0
    %v1155 = vadd.f32 0.0, %v1154
    %1156 = vmatmul.bf16.gmra.mxu0 %v323
    %v1157 = vpop.f32.mrf.mxu0
    %v1158 = vadd.f32 0.0, %v1157
    %v1159 = vpop.f32.mrf.mxu0
    %v1160 = vadd.f32 0.0, %v1159
    %1161 = vmatmul.bf16.gmra.mxu0 %v328
    %v1162 = vpop.f32.mrf.mxu0
    %v1163 = vadd.f32 0.0, %v1162
    %v1164 = vpop.f32.mrf.mxu0
    %v1165 = vadd.f32 0.0, %v1164
    %1166 = vmatmul.bf16.gmra.mxu0 %v333
    %v1167 = vpop.f32.mrf.mxu0
    %v1168 = vadd.f32 0.0, %v1167
    %v1169 = vpop.f32.mrf.mxu0
    %v1170 = vadd.f32 0.0, %v1169
    %1171 = vmatmul.bf16.gmra.mxu0 %v338
    %v1172 = vpop.f32.mrf.mxu0
    %v1173 = vadd.f32 0.0, %v1172
    %v1174 = vpop.f32.mrf.mxu0
    %v1175 = vadd.f32 0.0, %v1174
    %1176 = vmatmul.bf16.gmra.mxu0 %v343
    %v1177 = vpop.f32.mrf.mxu0
    %v1178 = vadd.f32 0.0, %v1177
    %v1179 = vpop.f32.mrf.mxu0
    %v1180 = vadd.f32 0.0, %v1179
    %1181 = vmatmul.bf16.gmra.mxu0 %v348
    %v1182 = vpop.f32.mrf.mxu0
    %v1183 = vadd.f32 0.0, %v1182
    %v1184 = vpop.f32.mrf.mxu0
    %v1185 = vadd.f32 0.0, %v1184
    %1186 = vdwg.mxu0
    %1187 = vmatpush.bf16.msra.mxu0 %v704
    %1188 = vmatpush.bf16.msra.mxu0 %v702
    %1189 = vmatpush.bf16.msra.mxu0 %v700
    %1190 = vmatpush.bf16.msra.mxu0 %v698
    %1191 = vmatpush.bf16.msra.mxu0 %v696
    %1192 = vmatpush.bf16.msra.mxu0 %v694
    %1193 = vmatpush.bf16.msra.mxu0 %v692
    %1194 = vmatpush.bf16.msra.mxu0 %v690
    %1195 = vmatmul.bf16.gmra.mxu0 %v304
    %v1196 = vpop.f32.mrf.mxu0
    %v1197 = vadd.f32 %v1138, %v1196
    %v1198 = vpop.f32.mrf.mxu0
    %v1199 = vadd.f32 %v1140, %v1198
    %1200 = vmatmul.bf16.gmra.mxu0 %v309
    %v1201 = vpop.f32.mrf.mxu0
    %v1202 = vadd.f32 %v1143, %v1201
    %v1203 = vpop.f32.mrf.mxu0
    %v1204 = vadd.f32 %v1145, %v1203
    %1205 = vmatmul.bf16.gmra.mxu0 %v314
    %v1206 = vpop.f32.mrf.mxu0
    %v1207 = vadd.f32 %v1148, %v1206
    %v1208 = vpop.f32.mrf.mxu0
    %v1209 = vadd.f32 %v1150, %v1208
    %1210 = vmatmul.bf16.gmra.mxu0 %v319
    %v1211 = vpop.f32.mrf.mxu0
    %v1212 = vadd.f32 %v1153, %v1211
    %v1213 = vpop.f32.mrf.mxu0
    %v1214 = vadd.f32 %v1155, %v1213
    %1215 = vmatmul.bf16.gmra.mxu0 %v324
    %v1216 = vpop.f32.mrf.mxu0
    %v1217 = vadd.f32 %v1158, %v1216
    %v1218 = vpop.f32.mrf.mxu0
    %v1219 = vadd.f32 %v1160, %v1218
    %1220 = vmatmul.bf16.gmra.mxu0 %v329
    %v1221 = vpop.f32.mrf.mxu0
    %v1222 = vadd.f32 %v1163, %v1221
    %v1223 = vpop.f32.mrf.mxu0
    %v1224 = vadd.f32 %v1165, %v1223
    %1225 = vmatmul.bf16.gmra.mxu0 %v334
    %v1226 = vpop.f32.mrf.mxu0
    %v1227 = vadd.f32 %v1168, %v1226
    %v1228 = vpop.f32.mrf.mxu0
    %v1229 = vadd.f32 %v1170, %v1228
    %1230 = vmatmul.bf16.gmra.mxu0 %v339
    %v1231 = vpop.f32.mrf.mxu0
    %v1232 = vadd.f32 %v1173, %v1231
    %v1233 = vpop.f32.mrf.mxu0
    %v1234 = vadd.f32 %v1175, %v1233
    %1235 = vmatmul.bf16.gmra.mxu0 %v344
    %v1236 = vpop.f32.mrf.mxu0
    %v1237 = vadd.f32 %v1178, %v1236
    %v1238 = vpop.f32.mrf.mxu0
    %v1239 = vadd.f32 %v1180, %v1238
    %1240 = vmatmul.bf16.gmra.mxu0 %v349
    %v1241 = vpop.f32.mrf.mxu0
    %v1242 = vadd.f32 %v1183, %v1241
    %v1243 = vpop.f32.mrf.mxu0
    %v1244 = vadd.f32 %v1185, %v1243
    %1245 = vdwg.mxu0
    %1246 = vmatpush.bf16.msra.mxu0 %v720
    %1247 = vmatpush.bf16.msra.mxu0 %v718
    %1248 = vmatpush.bf16.msra.mxu0 %v716
    %1249 = vmatpush.bf16.msra.mxu0 %v714
    %1250 = vmatpush.bf16.msra.mxu0 %v712
    %1251 = vmatpush.bf16.msra.mxu0 %v710
    %1252 = vmatpush.bf16.msra.mxu0 %v708
    %1253 = vmatpush.bf16.msra.mxu0 %v706
    %1254 = vmatmul.bf16.gmra.mxu0 %v305
    %v1255 = vpop.f32.mrf.mxu0
    %v1256 = vadd.f32 %v1197, %v1255
    %v1257 = vpop.f32.mrf.mxu0
    %v1258 = vadd.f32 %v1199, %v1257
    %1259 = vmatmul.bf16.gmra.mxu0 %v310
    %v1260 = vpop.f32.mrf.mxu0
    %v1261 = vadd.f32 %v1202, %v1260
    %v1262 = vpop.f32.mrf.mxu0
    %v1263 = vadd.f32 %v1204, %v1262
    %1264 = vmatmul.bf16.gmra.mxu0 %v315
    %v1265 = vpop.f32.mrf.mxu0
    %v1266 = vadd.f32 %v1207, %v1265
    %v1267 = vpop.f32.mrf.mxu0
    %v1268 = vadd.f32 %v1209, %v1267
    %1269 = vmatmul.bf16.gmra.mxu0 %v320
    %v1270 = vpop.f32.mrf.mxu0
    %v1271 = vadd.f32 %v1212, %v1270
    %v1272 = vpop.f32.mrf.mxu0
    %v1273 = vadd.f32 %v1214, %v1272
    %1274 = vmatmul.bf16.gmra.mxu0 %v325
    %v1275 = vpop.f32.mrf.mxu0
    %v1276 = vadd.f32 %v1217, %v1275
    %v1277 = vpop.f32.mrf.mxu0
    %v1278 = vadd.f32 %v1219, %v1277
    %1279 = vmatmul.bf16.gmra.mxu0 %v330
    %v1280 = vpop.f32.mrf.mxu0
    %v1281 = vadd.f32 %v1222, %v1280
    %v1282 = vpop.f32.mrf.mxu0
    %v1283 = vadd.f32 %v1224, %v1282
    %1284 = vmatmul.bf16.gmra.mxu0 %v335
    %v1285 = vpop.f32.mrf.mxu0
    %v1286 = vadd.f32 %v1227, %v1285
    %v1287 = vpop.f32.mrf.mxu0
    %v1288 = vadd.f32 %v1229, %v1287
    %1289 = vmatmul.bf16.gmra.mxu0 %v340
    %v1290 = vpop.f32.mrf.mxu0
    %v1291 = vadd.f32 %v1232, %v1290
    %v1292 = vpop.f32.mrf.mxu0
    %v1293 = vadd.f32 %v1234, %v1292
    %1294 = vmatmul.bf16.gmra.mxu0 %v345
    %v1295 = vpop.f32.mrf.mxu0
    %v1296 = vadd.f32 %v1237, %v1295
    %v1297 = vpop.f32.mrf.mxu0
    %v1298 = vadd.f32 %v1239, %v1297
    %1299 = vmatmul.bf16.gmra.mxu0 %v350
    %v1300 = vpop.f32.mrf.mxu0
    %v1301 = vadd.f32 %v1242, %v1300
    %v1302 = vpop.f32.mrf.mxu0
    %v1303 = vadd.f32 %v1244, %v1302
    %1304 = vdwg.mxu0
    %1305 = vmatpush.bf16.msra.mxu0 %v736
    %1306 = vmatpush.bf16.msra.mxu0 %v734
    %1307 = vmatpush.bf16.msra.mxu0 %v732
    %1308 = vmatpush.bf16.msra.mxu0 %v730
    %1309 = vmatpush.bf16.msra.mxu0 %v728
    %1310 = vmatpush.bf16.msra.mxu0 %v726
    %1311 = vmatpush.bf16.msra.mxu0 %v724
    %1312 = vmatpush.bf16.msra.mxu0 %v722
    %1313 = vmatmul.bf16.gmra.mxu0 %v306
    %v1314 = vpop.f32.mrf.mxu0
    %v1315 = vadd.f32 %v1256, %v1314
    %v1316 = vpop.f32.mrf.mxu0
    %v1317 = vadd.f32 %v1258, %v1316
    %1318 = vmatmul.bf16.gmra.mxu0 %v311
    %v1319 = vpop.f32.mrf.mxu0
    %v1320 = vadd.f32 %v1261, %v1319
    %v1321 = vpop.f32.mrf.mxu0
    %v1322 = vadd.f32 %v1263, %v1321
    %1323 = vmatmul.bf16.gmra.mxu0 %v316
    %v1324 = vpop.f32.mrf.mxu0
    %v1325 = vadd.f32 %v1266, %v1324
    %v1326 = vpop.f32.mrf.mxu0
    %v1327 = vadd.f32 %v1268, %v1326
    %1328 = vmatmul.bf16.gmra.mxu0 %v321
    %v1329 = vpop.f32.mrf.mxu0
    %v1330 = vadd.f32 %v1271, %v1329
    %v1331 = vpop.f32.mrf.mxu0
    %v1332 = vadd.f32 %v1273, %v1331
    %1333 = vmatmul.bf16.gmra.mxu0 %v326
    %v1334 = vpop.f32.mrf.mxu0
    %v1335 = vadd.f32 %v1276, %v1334
    %v1336 = vpop.f32.mrf.mxu0
    %v1337 = vadd.f32 %v1278, %v1336
    %1338 = vmatmul.bf16.gmra.mxu0 %v331
    %v1339 = vpop.f32.mrf.mxu0
    %v1340 = vadd.f32 %v1281, %v1339
    %v1341 = vpop.f32.mrf.mxu0
    %v1342 = vadd.f32 %v1283, %v1341
    %1343 = vmatmul.bf16.gmra.mxu0 %v336
    %v1344 = vpop.f32.mrf.mxu0
    %v1345 = vadd.f32 %v1286, %v1344
    %v1346 = vpop.f32.mrf.mxu0
    %v1347 = vadd.f32 %v1288, %v1346
    %1348 = vmatmul.bf16.gmra.mxu0 %v341
    %v1349 = vpop.f32.mrf.mxu0
    %v1350 = vadd.f32 %v1291, %v1349
    %v1351 = vpop.f32.mrf.mxu0
    %v1352 = vadd.f32 %v1293, %v1351
    %1353 = vmatmul.bf16.gmra.mxu0 %v346
    %v1354 = vpop.f32.mrf.mxu0
    %v1355 = vadd.f32 %v1296, %v1354
    %v1356 = vpop.f32.mrf.mxu0
    %v1357 = vadd.f32 %v1298, %v1356
    %1358 = vmatmul.bf16.gmra.mxu0 %v351
    %v1359 = vpop.f32.mrf.mxu0
    %v1360 = vadd.f32 %v1301, %v1359
    %v1361 = vpop.f32.mrf.mxu0
    %v1362 = vadd.f32 %v1303, %v1361
    %1363 = vdwg.mxu0
    %1364 = vmatpush.bf16.msra.mxu0 %v752
    %1365 = vmatpush.bf16.msra.mxu0 %v750
    %1366 = vmatpush.bf16.msra.mxu0 %v748
    %1367 = vmatpush.bf16.msra.mxu0 %v746
    %1368 = vmatpush.bf16.msra.mxu0 %v744
    %1369 = vmatpush.bf16.msra.mxu0 %v742
    %1370 = vmatpush.bf16.msra.mxu0 %v740
    %1371 = vmatpush.bf16.msra.mxu0 %v738
    %1372 = vmatmul.bf16.gmra.mxu0 %v307
    %v1373 = vpop.f32.mrf.mxu0
    %v1374 = vadd.f32 %v1315, %v1373
    %v1375 = vpop.f32.mrf.mxu0
    %v1376 = vadd.f32 %v1317, %v1375
    %1377 = vmatmul.bf16.gmra.mxu0 %v312
    %v1378 = vpop.f32.mrf.mxu0
    %v1379 = vadd.f32 %v1320, %v1378
    %v1380 = vpop.f32.mrf.mxu0
    %v1381 = vadd.f32 %v1322, %v1380
    %1382 = vmatmul.bf16.gmra.mxu0 %v317
    %v1383 = vpop.f32.mrf.mxu0
    %v1384 = vadd.f32 %v1325, %v1383
    %v1385 = vpop.f32.mrf.mxu0
    %v1386 = vadd.f32 %v1327, %v1385
    %1387 = vmatmul.bf16.gmra.mxu0 %v322
    %v1388 = vpop.f32.mrf.mxu0
    %v1389 = vadd.f32 %v1330, %v1388
    %v1390 = vpop.f32.mrf.mxu0
    %v1391 = vadd.f32 %v1332, %v1390
    %1392 = vmatmul.bf16.gmra.mxu0 %v327
    %v1393 = vpop.f32.mrf.mxu0
    %v1394 = vadd.f32 %v1335, %v1393
    %v1395 = vpop.f32.mrf.mxu0
    %v1396 = vadd.f32 %v1337, %v1395
    %1397 = vmatmul.bf16.gmra.mxu0 %v332
    %v1398 = vpop.f32.mrf.mxu0
    %v1399 = vadd.f32 %v1340, %v1398
    %v1400 = vpop.f32.mrf.mxu0
    %v1401 = vadd.f32 %v1342, %v1400
    %1402 = vmatmul.bf16.gmra.mxu0 %v337
    %v1403 = vpop.f32.mrf.mxu0
    %v1404 = vadd.f32 %v1345, %v1403
    %v1405 = vpop.f32.mrf.mxu0
    %v1406 = vadd.f32 %v1347, %v1405
    %1407 = vmatmul.bf16.gmra.mxu0 %v342
    %v1408 = vpop.f32.mrf.mxu0
    %v1409 = vadd.f32 %v1350, %v1408
    %v1410 = vpop.f32.mrf.mxu0
    %v1411 = vadd.f32 %v1352, %v1410
    %1412 = vmatmul.bf16.gmra.mxu0 %v347
    %v1413 = vpop.f32.mrf.mxu0
    %v1414 = vadd.f32 %v1355, %v1413
    %v1415 = vpop.f32.mrf.mxu0
    %v1416 = vadd.f32 %v1357, %v1415
    %1417 = vmatmul.bf16.gmra.mxu0 %v352
    %v1418 = vpop.f32.mrf.mxu0
    %v1419 = vadd.f32 %v1360, %v1418
    %v1420 = vpop.f32.mrf.mxu0
    %v1421 = vadd.f32 %v1362, %v1420
    %1422 = vdwg.mxu0
    %1423 = vst [vmem:[#allocation2] sm:$0xff] %v1079
    %vm1424 = vcmask 556032
    %1425 = vst.msk [vmem:[#allocation2 + $0x8] sm:$0xff] %vm1424, %v1374
    %1426 = vst [vmem:[#allocation2 + $0x10] sm:$0xff] %v1081
    %1427 = vst.msk [vmem:[#allocation2 + $0x18] sm:$0xff] %vm1424, %v1376
    %1428 = vst [vmem:[#allocation2 + $0x20] sm:$0xff] %v1084
    %1429 = vst.msk [vmem:[#allocation2 + $0x28] sm:$0xff] %vm1424, %v1379
    %1430 = vst [vmem:[#allocation2 + $0x30] sm:$0xff] %v1086
    %1431 = vst.msk [vmem:[#allocation2 + $0x38] sm:$0xff] %vm1424, %v1381
    %1432 = vst [vmem:[#allocation2 + $0x40] sm:$0xff] %v1089
    %1433 = vst.msk [vmem:[#allocation2 + $0x48] sm:$0xff] %vm1424, %v1384
    %1434 = vst [vmem:[#allocation2 + $0x50] sm:$0xff] %v1091
    %1435 = vst.msk [vmem:[#allocation2 + $0x58] sm:$0xff] %vm1424, %v1386
    %1436 = vst [vmem:[#allocation2 + $0x60] sm:$0xff] %v1094
    %1437 = vst.msk [vmem:[#allocation2 + $0x68] sm:$0xff] %vm1424, %v1389
    %1438 = vst [vmem:[#allocation2 + $0x70] sm:$0xff] %v1096
    %1439 = vst.msk [vmem:[#allocation2 + $0x78] sm:$0xff] %vm1424, %v1391
    %1440 = vst [vmem:[#allocation2 + $0x80] sm:$0xff] %v1099
    %1441 = vst.msk [vmem:[#allocation2 + $0x88] sm:$0xff] %vm1424, %v1394
    %1442 = vst [vmem:[#allocation2 + $0x90] sm:$0xff] %v1101
    %1443 = vst.msk [vmem:[#allocation2 + $0x98] sm:$0xff] %vm1424, %v1396
    %1444 = vst [vmem:[#allocation2 + $0xa0] sm:$0xff] %v1104
    %1445 = vst.msk [vmem:[#allocation2 + $0xa8] sm:$0xff] %vm1424, %v1399
    %1446 = vst [vmem:[#allocation2 + $0xb0] sm:$0xff] %v1106
    %1447 = vst.msk [vmem:[#allocation2 + $0xb8] sm:$0xff] %vm1424, %v1401
    %1448 = vst [vmem:[#allocation2 + $0xc0] sm:$0xff] %v1109
    %1449 = vst.msk [vmem:[#allocation2 + $0xc8] sm:$0xff] %vm1424, %v1404
    %1450 = vst [vmem:[#allocation2 + $0xd0] sm:$0xff] %v1111
    %1451 = vst.msk [vmem:[#allocation2 + $0xd8] sm:$0xff] %vm1424, %v1406
    %1452 = vst [vmem:[#allocation2 + $0xe0] sm:$0xff] %v1114
    %1453 = vst.msk [vmem:[#allocation2 + $0xe8] sm:$0xff] %vm1424, %v1409
    %1454 = vst [vmem:[#allocation2 + $0xf0] sm:$0xff] %v1116
    %1455 = vst.msk [vmem:[#allocation2 + $0xf8] sm:$0xff] %vm1424, %v1411
    %1456 = vst [vmem:[#allocation2 + $0x100] sm:$0xff] %v1119
    %1457 = vst.msk [vmem:[#allocation2 + $0x108] sm:$0xff] %vm1424, %v1414
    %1458 = vst [vmem:[#allocation2 + $0x110] sm:$0xff] %v1121
    %1459 = vst.msk [vmem:[#allocation2 + $0x118] sm:$0xff] %vm1424, %v1416
    %1460 = vst [vmem:[#allocation2 + $0x120] sm:$0xff] %v1124
    %1461 = vst.msk [vmem:[#allocation2 + $0x128] sm:$0xff] %vm1424, %v1419
    %1462 = vst [vmem:[#allocation2 + $0x130] sm:$0xff] %v1126
    %1463 = vst.msk [vmem:[#allocation2 + $0x138] sm:$0xff] %vm1424, %v1421
    // Predicated region
    $region14: #{tpu_custom_call.1} parent=1 // pred_check
      _
    $region15: #{tpu_custom_call.1} parent=1 // pred_check_branch
      %1465 = sbr.rel (0) target = $region17
    $region16: #{tpu_custom_call.1} parent=1 // pred_region
      %1467 = vsyncadd [#allocation3], 0
      %s1468 = sshll.u32 [#allocation2], 4
      %s1469 = int_to_ptr.vmem [resolvable:$true] %s1468
      %s1470 = sshll.u32 %s3, 4
      %s1471 = int_to_ptr.hbm [resolvable:$true] %s1470
      %1476 = dma.vmem_to_hbm [thread:$0]  %s1469, 5120, %s1471, [#allocation3], 256, 256, 16
    $region17: #{tpu_custom_call.1} parent=1 // pred_fallthru
      _
    // Predicated region
    $region18: #{tpu_custom_call.1} parent=1 // pred_check
      _
    $region19: #{tpu_custom_call.1} parent=1 // pred_check_branch
      %1478 = sbr.rel (0) target = $region21
    $region20: #{tpu_custom_call.1} parent=1 // pred_region
      %1480 = dma.done [#allocation3], 5120
    $region21: #{tpu_custom_call.1} parent=1 // pred_fallthru
      _
    %1481 = vsyncpa [#allocation3], 1

</llo_original>
